<compile_context>
chip_gen: v5e
topology: v5e:2x2
jax: 0.10.0
libtpu: 0.0.40
codegen_flags: <defaults>
</compile_context>

<pallas_src>
import functools

import jax
import jax.numpy as jnp
from jax import lax
from jax.experimental import pallas as pl
from jax.experimental.pallas import tpu as pltpu

KSIZE = 5
PAD = 2
BN_EPS = 1e-5

# 9 polyphase source shifts (dy, dx) and the 4 output parities (oy%2, ox%2).
_SHIFTS = tuple((dy, dx) for dy in (-1, 0, 1) for dx in (-1, 0, 1))
_PHASES = ((0, 0), (0, 1), (1, 0), (1, 1))


def _upconv_bn_relu_kernel(xpf_ref, wbig_ref, smask_ref, ovalid_ref, gamma_ref,
                           beta_ref, out_ref, patches_ref, *, cin, cout, hc, wc,
                           n, oh, ow):
    """Fused polyphase conv + BatchNorm(train) + ReLU.

    xpf_ref:    (Cin, L + 2*Wc + 2)  cropped source, (n,a,b) flattened to lanes,
                                     zero lane-halo of Wc+1 on both sides
    wbig_ref:   (4*Cout, 9*Cin)      polyphase weights (invalid taps zeroed)
    smask_ref:  (9, L)               validity mask per (dy,dx) shift (conv padding)
    ovalid_ref: (4, L)               per-parity mask of positions kept after crop
    gamma/beta: (Cout, 1)
    out_ref:    (4*Cout, L)          row p*Cout+co, col (n*Hc+a)*Wc+b
    patches_ref:(9*Cin, L)  scratch  im2col matrix (MXU rhs)
    """
    L = n * hc * wc

    # ---- im2col: 9 shifted lane-slices of the flat activation, boundary-masked ----
    for k, (dy, dx) in enumerate(_SHIFTS):
        start = (wc + 1) + dy * wc + dx                    # static lane offset
        blk = xpf_ref[:, start:start + L]                  # (Cin, L)
        patches_ref[k * cin:(k + 1) * cin, :] = blk * smask_ref[k:k + 1, :]

    # ---- the entire 5x5-on-upsampled conv as ONE MXU matmul ----
    z = jnp.dot(wbig_ref[...], patches_ref[...],
                preferred_element_type=jnp.float32)        # (4*Cout, L)

    # ---- BatchNorm2d batch statistics (biased variance) over valid positions ----
    s1 = jnp.zeros((cout, 1), jnp.float32)
    s2 = jnp.zeros((cout, 1), jnp.float32)
    for p in range(4):
        zp = z[p * cout:(p + 1) * cout, :] * ovalid_ref[p:p + 1, :]
        s1 = s1 + jnp.sum(zp, axis=1, keepdims=True)
        s2 = s2 + jnp.sum(zp * zp, axis=1, keepdims=True)
    inv_cnt = 1.0 / float(n * oh * ow)
    mean = s1 * inv_cnt
    # E[x^2]-E[x]^2 kept in f32; switch to a two-pass/Welford form if N*OH*OW gets huge.
    var = s2 * inv_cnt - mean * mean
    scale = gamma_ref[...] * lax.rsqrt(var + BN_EPS)       # gamma folded into scale
    bias = beta_ref[...] - mean * scale

    # ---- normalize + ReLU; (4*Cout, L) lane-dense stores ----
    for p in range(4):
        zp = z[p * cout:(p + 1) * cout, :]
        out_ref[p * cout:(p + 1) * cout, :] = jnp.maximum(zp * scale + bias, 0.0)


def simple_gudi_upconv_block(x_nchw, conv_w_oihw, gamma, beta, oheight=0, owidth=0):
    """Forward pass of Simple_Gudi_UpConv_Block. Input/output in NCHW (PyTorch)."""
    N, Cin, H, W = x_nchw.shape
    Cout = conv_w_oihw.shape[0]
    crop = (oheight != 0 and owidth != 0)
    OH = oheight if crop else 2 * H
    OW = owidth if crop else 2 * W
    Hc = -(-OH // 2)         # only source rows/cols with 2*i < OH/OW survive the crop
    Wc = -(-OW // 2)
    L = N * Hc * Wc
    f32 = jnp.float32

    # -- activation: crop + (n,a,b)->lanes flatten + zero lane-halo (tiny layout pass) --
    xs = x_nchw[:, :, :Hc, :Wc].astype(f32)
    xf = jnp.transpose(xs, (1, 0, 2, 3)).reshape(Cin, L)
    xpf = jnp.pad(xf, ((0, 0), (Wc + 1, Wc + 1)))

    # -- polyphase weights: Wbig[p*Cout+co, k*Cin+ci] = w[co,ci, 2dy+2-py, 2dx+2-px] or 0 --
    w = conv_w_oihw.astype(f32)
    rows = []
    for (py, px) in _PHASES:
        cols = []
        for (dy, dx) in _SHIFTS:
            ky, kx = 2 * dy + 2 - py, 2 * dx + 2 - px
            if 0 <= ky < KSIZE and 0 <= kx < KSIZE:
                cols.append(w[:, :, ky, kx])               # (Cout, Cin)
            else:
                cols.append(jnp.zeros((Cout, Cin), f32))
        rows.append(jnp.concatenate(cols, axis=1))         # (Cout, 9*Cin)
    w_big = jnp.concatenate(rows, axis=0)                  # (4*Cout, 9*Cin)

    # -- shape-only boundary / crop masks (constants) --
    l_idx = jnp.arange(L, dtype=jnp.int32)
    a_idx = (l_idx // Wc) % Hc
    b_idx = l_idx % Wc
    smask = jnp.stack(
        [((a_idx + dy >= 0) & (a_idx + dy < Hc) &
          (b_idx + dx >= 0) & (b_idx + dx < Wc)).astype(f32)
         for (dy, dx) in _SHIFTS], axis=0)                 # (9, L)
    ovalid = jnp.stack(
        [((2 * a_idx + py < OH) & (2 * b_idx + px < OW)).astype(f32)
         for (py, px) in _PHASES], axis=0)                 # (4, L)

    kernel = functools.partial(_upconv_bn_relu_kernel, cin=Cin, cout=Cout,
                               hc=Hc, wc=Wc, n=N, oh=OH, ow=OW)
    out_flat = pl.pallas_call(
        kernel,
        out_shape=jax.ShapeDtypeStruct((4 * Cout, L), f32),
        in_specs=[pl.BlockSpec(memory_space=pltpu.MemorySpace.VMEM)] * 6,
        out_specs=pl.BlockSpec(memory_space=pltpu.MemorySpace.VMEM),
        scratch_shapes=[pltpu.VMEM((9 * Cin, L), f32)],
    )(xpf, w_big, smask, ovalid,
      gamma.reshape(Cout, 1).astype(f32), beta.reshape(Cout, 1).astype(f32))

    # -- un-interleave the 4 parities back to NCHW (single small layout pass) --
    o = out_flat.reshape(2, 2, Cout, N, Hc, Wc)            # (py, px, co, n, a, b)
    o = jnp.transpose(o, (3, 2, 4, 0, 5, 1)).reshape(N, Cout, 2 * Hc, 2 * Wc)
    return o[:, :, :OH, :OW]


def _reference(x_nchw, w, gamma, beta, oheight, owidth):
    """Pure-JAX reference matching the PyTorch module (train-mode BN)."""
    N, Cin, H, W = x_nchw.shape
    up = jnp.zeros((N, Cin, 2 * H, 2 * W), x_nchw.dtype).at[:, :, ::2, ::2].set(x_nchw)
    if oheight != 0 and owidth != 0:
        up = up[:, :, :oheight, :owidth]
    conv = lax.conv_general_dilated(
        up, w, window_strides=(1, 1), padding=((PAD, PAD), (PAD, PAD)),
        dimension_numbers=("NCHW", "OIHW", "NCHW"),
        precision=lax.Precision.HIGHEST)
    mean = jnp.mean(conv, axis=(0, 2, 3), keepdims=True)
    var = jnp.mean((conv - mean) ** 2, axis=(0, 2, 3), keepdims=True)
    y = (conv - mean) * lax.rsqrt(var + BN_EPS) * gamma.reshape(1, -1, 1, 1) \
        + beta.reshape(1, -1, 1, 1)
    return jnp.maximum(y, 0.0)


if __name__ == "__main__":
    key = jax.random.PRNGKey(0)
    k1, k2, k3, k4 = jax.random.split(key, 4)

    # in_channels=4, out_channels=8, input 16x16 -> unpool 32x32 -> narrow to 30x30
    N, Cin, H, W = 2, 4, 16, 16
    Cout = 8
    oheight, owidth = 30, 30

    x = jax.random.normal(k1, (N, Cin, H, W), jnp.float32)
    conv_w = 0.1 * jax.random.normal(k2, (Cout, Cin, KSIZE, KSIZE), jnp.float32)
    gamma = 1.0 + 0.1 * jax.random.normal(k3, (Cout,), jnp.float32)   # bn1.weight
    beta = 0.1 * jax.random.normal(k4, (Cout,), jnp.float32)          # bn1.bias

    fwd = jax.jit(functools.partial(simple_gudi_upconv_block,
                                    oheight=oheight, owidth=owidth))
    out = jax.block_until_ready(fwd(x, conv_w, gamma, beta))

    ref = _reference(x, conv_w, gamma, beta, oheight, owidth)
    assert out.shape == ref.shape == (N, Cout, oheight, owidth), (out.shape, ref.shape)
    max_err = float(jnp.max(jnp.abs(out - ref)))
    # tolerance leaves room for MXU f32 pass rounding; layout/index bugs would be O(1).
    if max_err > 1e-2:
        raise AssertionError(f"Pallas kernel mismatch vs reference: max abs err = {max_err}")

    print("KERNEL_OK")
</pallas_src>

<mosaic_0001>
module attributes {stable_mosaic.version = 11 : i64} {
  func.func @_upconv_bn_relu_kernel(%arg0: memref<4x482xf32, #tpu.memory_space<vmem>>, %arg1: memref<32x36xf32, #tpu.memory_space<vmem>>, %arg2: memref<9x450xf32, #tpu.memory_space<vmem>>, %arg3: memref<4x450xf32, #tpu.memory_space<vmem>>, %arg4: memref<8x1xf32, #tpu.memory_space<vmem>>, %arg5: memref<8x1xf32, #tpu.memory_space<vmem>>, %arg6: memref<32x450xf32, #tpu.memory_space<vmem>>, %arg7: memref<36x450xf32, #tpu.memory_space<vmem>>) attributes {dimension_semantics = [], scalar_prefetch = 0 : i64, scratch_operands = 1 : i64, tpu.core_type = #tpu.core_type<tc>} {
    %c0 = arith.constant 0 : index
    %c0_0 = arith.constant 0 : index
    %0 = vector.load %arg0[%c0, %c0_0] : memref<4x482xf32, #tpu.memory_space<vmem>>, vector<4x450xf32>
    %c0_1 = arith.constant 0 : index
    %c0_2 = arith.constant 0 : index
    %1 = vector.load %arg2[%c0_1, %c0_2] : memref<9x450xf32, #tpu.memory_space<vmem>>, vector<1x450xf32>
    %2 = vector.broadcast %1 : vector<1x450xf32> to vector<4x450xf32>
    %3 = arith.mulf %0, %2 : vector<4x450xf32>
    %c0_3 = arith.constant 0 : index
    %c0_4 = arith.constant 0 : index
    %4 = vector.load %arg7[%c0_3, %c0_4] : memref<36x450xf32, #tpu.memory_space<vmem>>, vector<4x450xf32>
    tpu.vector_store %arg7[%c0_3, %c0_4], %3 {strides = array<i32>} : memref<36x450xf32, #tpu.memory_space<vmem>>, vector<4x450xf32>,
    %c0_5 = arith.constant 0 : index
    %c1 = arith.constant 1 : index
    %5 = vector.load %arg0[%c0_5, %c1] : memref<4x482xf32, #tpu.memory_space<vmem>>, vector<4x450xf32>
    %c1_6 = arith.constant 1 : index
    %c0_7 = arith.constant 0 : index
    %6 = vector.load %arg2[%c1_6, %c0_7] : memref<9x450xf32, #tpu.memory_space<vmem>>, vector<1x450xf32>
    %7 = vector.broadcast %6 : vector<1x450xf32> to vector<4x450xf32>
    %8 = arith.mulf %5, %7 : vector<4x450xf32>
    %c4 = arith.constant 4 : index
    %c0_8 = arith.constant 0 : index
    %9 = vector.load %arg7[%c4, %c0_8] : memref<36x450xf32, #tpu.memory_space<vmem>>, vector<4x450xf32>
    tpu.vector_store %arg7[%c4, %c0_8], %8 {strides = array<i32>} : memref<36x450xf32, #tpu.memory_space<vmem>>, vector<4x450xf32>,
    %c0_9 = arith.constant 0 : index
    %c2 = arith.constant 2 : index
    %10 = vector.load %arg0[%c0_9, %c2] : memref<4x482xf32, #tpu.memory_space<vmem>>, vector<4x450xf32>
    %c2_10 = arith.constant 2 : index
    %c0_11 = arith.constant 0 : index
    %11 = vector.load %arg2[%c2_10, %c0_11] : memref<9x450xf32, #tpu.memory_space<vmem>>, vector<1x450xf32>
    %12 = vector.broadcast %11 : vector<1x450xf32> to vector<4x450xf32>
    %13 = arith.mulf %10, %12 : vector<4x450xf32>
    %c8 = arith.constant 8 : index
    %c0_12 = arith.constant 0 : index
    %14 = vector.load %arg7[%c8, %c0_12] : memref<36x450xf32, #tpu.memory_space<vmem>>, vector<4x450xf32>
    tpu.vector_store %arg7[%c8, %c0_12], %13 {strides = array<i32>} : memref<36x450xf32, #tpu.memory_space<vmem>>, vector<4x450xf32>,
    %c0_13 = arith.constant 0 : index
    %c15 = arith.constant 15 : index
    %15 = vector.load %arg0[%c0_13, %c15] : memref<4x482xf32, #tpu.memory_space<vmem>>, vector<4x450xf32>
    %c3 = arith.constant 3 : index
    %c0_14 = arith.constant 0 : index
    %16 = vector.load %arg2[%c3, %c0_14] : memref<9x450xf32, #tpu.memory_space<vmem>>, vector<1x450xf32>
    %17 = vector.broadcast %16 : vector<1x450xf32> to vector<4x450xf32>
    %18 = arith.mulf %15, %17 : vector<4x450xf32>
    %c12 = arith.constant 12 : index
    %c0_15 = arith.constant 0 : index
    %19 = vector.load %arg7[%c12, %c0_15] : memref<36x450xf32, #tpu.memory_space<vmem>>, vector<4x450xf32>
    tpu.vector_store %arg7[%c12, %c0_15], %18 {strides = array<i32>} : memref<36x450xf32, #tpu.memory_space<vmem>>, vector<4x450xf32>,
    %c0_16 = arith.constant 0 : index
    %c16 = arith.constant 16 : index
    %20 = vector.load %arg0[%c0_16, %c16] : memref<4x482xf32, #tpu.memory_space<vmem>>, vector<4x450xf32>
    %c4_17 = arith.constant 4 : index
    %c0_18 = arith.constant 0 : index
    %21 = vector.load %arg2[%c4_17, %c0_18] : memref<9x450xf32, #tpu.memory_space<vmem>>, vector<1x450xf32>
    %22 = vector.broadcast %21 : vector<1x450xf32> to vector<4x450xf32>
    %23 = arith.mulf %20, %22 : vector<4x450xf32>
    %c16_19 = arith.constant 16 : index
    %c0_20 = arith.constant 0 : index
    %24 = vector.load %arg7[%c16_19, %c0_20] : memref<36x450xf32, #tpu.memory_space<vmem>>, vector<4x450xf32>
    tpu.vector_store %arg7[%c16_19, %c0_20], %23 {strides = array<i32>} : memref<36x450xf32, #tpu.memory_space<vmem>>, vector<4x450xf32>,
    %c0_21 = arith.constant 0 : index
    %c17 = arith.constant 17 : index
    %25 = vector.load %arg0[%c0_21, %c17] : memref<4x482xf32, #tpu.memory_space<vmem>>, vector<4x450xf32>
    %c5 = arith.constant 5 : index
    %c0_22 = arith.constant 0 : index
    %26 = vector.load %arg2[%c5, %c0_22] : memref<9x450xf32, #tpu.memory_space<vmem>>, vector<1x450xf32>
    %27 = vector.broadcast %26 : vector<1x450xf32> to vector<4x450xf32>
    %28 = arith.mulf %25, %27 : vector<4x450xf32>
    %c20 = arith.constant 20 : index
    %c0_23 = arith.constant 0 : index
    %29 = vector.load %arg7[%c20, %c0_23] : memref<36x450xf32, #tpu.memory_space<vmem>>, vector<4x450xf32>
    tpu.vector_store %arg7[%c20, %c0_23], %28 {strides = array<i32>} : memref<36x450xf32, #tpu.memory_space<vmem>>, vector<4x450xf32>,
    %c0_24 = arith.constant 0 : index
    %c30 = arith.constant 30 : index
    %30 = vector.load %arg0[%c0_24, %c30] : memref<4x482xf32, #tpu.memory_space<vmem>>, vector<4x450xf32>
    %c6 = arith.constant 6 : index
    %c0_25 = arith.constant 0 : index
    %31 = vector.load %arg2[%c6, %c0_25] : memref<9x450xf32, #tpu.memory_space<vmem>>, vector<1x450xf32>
    %32 = vector.broadcast %31 : vector<1x450xf32> to vector<4x450xf32>
    %33 = arith.mulf %30, %32 : vector<4x450xf32>
    %c24 = arith.constant 24 : index
    %c0_26 = arith.constant 0 : index
    %34 = vector.load %arg7[%c24, %c0_26] : memref<36x450xf32, #tpu.memory_space<vmem>>, vector<4x450xf32>
    tpu.vector_store %arg7[%c24, %c0_26], %33 {strides = array<i32>} : memref<36x450xf32, #tpu.memory_space<vmem>>, vector<4x450xf32>,
    %c0_27 = arith.constant 0 : index
    %c31 = arith.constant 31 : index
    %35 = vector.load %arg0[%c0_27, %c31] : memref<4x482xf32, #tpu.memory_space<vmem>>, vector<4x450xf32>
    %c7 = arith.constant 7 : index
    %c0_28 = arith.constant 0 : index
    %36 = vector.load %arg2[%c7, %c0_28] : memref<9x450xf32, #tpu.memory_space<vmem>>, vector<1x450xf32>
    %37 = vector.broadcast %36 : vector<1x450xf32> to vector<4x450xf32>
    %38 = arith.mulf %35, %37 : vector<4x450xf32>
    %c28 = arith.constant 28 : index
    %c0_29 = arith.constant 0 : index
    %39 = vector.load %arg7[%c28, %c0_29] : memref<36x450xf32, #tpu.memory_space<vmem>>, vector<4x450xf32>
    tpu.vector_store %arg7[%c28, %c0_29], %38 {strides = array<i32>} : memref<36x450xf32, #tpu.memory_space<vmem>>, vector<4x450xf32>,
    %c0_30 = arith.constant 0 : index
    %c32 = arith.constant 32 : index
    %40 = vector.load %arg0[%c0_30, %c32] : memref<4x482xf32, #tpu.memory_space<vmem>>, vector<4x450xf32>
    %c8_31 = arith.constant 8 : index
    %c0_32 = arith.constant 0 : index
    %41 = vector.load %arg2[%c8_31, %c0_32] : memref<9x450xf32, #tpu.memory_space<vmem>>, vector<1x450xf32>
    %42 = vector.broadcast %41 : vector<1x450xf32> to vector<4x450xf32>
    %43 = arith.mulf %40, %42 : vector<4x450xf32>
    %c32_33 = arith.constant 32 : index
    %c0_34 = arith.constant 0 : index
    %44 = vector.load %arg7[%c32_33, %c0_34] : memref<36x450xf32, #tpu.memory_space<vmem>>, vector<4x450xf32>
    tpu.vector_store %arg7[%c32_33, %c0_34], %43 {strides = array<i32>} : memref<36x450xf32, #tpu.memory_space<vmem>>, vector<4x450xf32>,
    %c0_35 = arith.constant 0 : index
    %c0_36 = arith.constant 0 : index
    %45 = vector.load %arg1[%c0_35, %c0_36] : memref<32x36xf32, #tpu.memory_space<vmem>>, vector<32x36xf32>
    %c0_37 = arith.constant 0 : index
    %c0_38 = arith.constant 0 : index
    %46 = vector.load %arg7[%c0_37, %c0_38] : memref<36x450xf32, #tpu.memory_space<vmem>>, vector<36x450xf32>
    %cst = arith.constant dense<0.000000e+00> : vector<32x450xf32>
    %47 = tpu.matmul %45, %46, %cst {dimension_numbers = #tpu.dot_dimension_numbers<[1], [0], [0], [1], [0, 0, 1, 1], [], []>} : vector<32x36xf32>, vector<36x450xf32>, vector<32x450xf32> -> vector<32x450xf32>
    %cst_39 = arith.constant 0.000000e+00 : f32
    %48 = vector.broadcast %cst_39 : f32 to vector<8x1xf32>
    %cst_40 = arith.constant 0.000000e+00 : f32
    %49 = vector.broadcast %cst_40 : f32 to vector<8x1xf32>
    %50 = vector.extract_strided_slice %47 {offsets = [0, 0], sizes = [8, 450], strides = [1, 1]} : vector<32x450xf32> to vector<8x450xf32>
    %c0_41 = arith.constant 0 : index
    %c0_42 = arith.constant 0 : index
    %51 = vector.load %arg3[%c0_41, %c0_42] : memref<4x450xf32, #tpu.memory_space<vmem>>, vector<1x450xf32>
    %52 = vector.broadcast %51 : vector<1x450xf32> to vector<8x450xf32>
    %53 = arith.mulf %50, %52 : vector<8x450xf32>
    %cst_43 = arith.constant dense<0.000000e+00> : vector<8xf32>
    %54 = vector.multi_reduction <add>, %53, %cst_43 [1] : vector<8x450xf32> to vector<8xf32>
    %55 = vector.shape_cast %54 : vector<8xf32> to vector<8x1xf32>
    %56 = arith.addf %48, %55 : vector<8x1xf32>
    %57 = arith.mulf %53, %53 : vector<8x450xf32>
    %cst_44 = arith.constant dense<0.000000e+00> : vector<8xf32>
    %58 = vector.multi_reduction <add>, %57, %cst_44 [1] : vector<8x450xf32> to vector<8xf32>
    %59 = vector.shape_cast %58 : vector<8xf32> to vector<8x1xf32>
    %60 = arith.addf %49, %59 : vector<8x1xf32>
    %61 = vector.extract_strided_slice %47 {offsets = [8, 0], sizes = [8, 450], strides = [1, 1]} : vector<32x450xf32> to vector<8x450xf32>
    %c1_45 = arith.constant 1 : index
    %c0_46 = arith.constant 0 : index
    %62 = vector.load %arg3[%c1_45, %c0_46] : memref<4x450xf32, #tpu.memory_space<vmem>>, vector<1x450xf32>
    %63 = vector.broadcast %62 : vector<1x450xf32> to vector<8x450xf32>
    %64 = arith.mulf %61, %63 : vector<8x450xf32>
    %cst_47 = arith.constant dense<0.000000e+00> : vector<8xf32>
    %65 = vector.multi_reduction <add>, %64, %cst_47 [1] : vector<8x450xf32> to vector<8xf32>
    %66 = vector.shape_cast %65 : vector<8xf32> to vector<8x1xf32>
    %67 = arith.addf %56, %66 : vector<8x1xf32>
    %68 = arith.mulf %64, %64 : vector<8x450xf32>
    %cst_48 = arith.constant dense<0.000000e+00> : vector<8xf32>
    %69 = vector.multi_reduction <add>, %68, %cst_48 [1] : vector<8x450xf32> to vector<8xf32>
    %70 = vector.shape_cast %69 : vector<8xf32> to vector<8x1xf32>
    %71 = arith.addf %60, %70 : vector<8x1xf32>
    %72 = vector.extract_strided_slice %47 {offsets = [16, 0], sizes = [8, 450], strides = [1, 1]} : vector<32x450xf32> to vector<8x450xf32>
    %c2_49 = arith.constant 2 : index
    %c0_50 = arith.constant 0 : index
    %73 = vector.load %arg3[%c2_49, %c0_50] : memref<4x450xf32, #tpu.memory_space<vmem>>, vector<1x450xf32>
    %74 = vector.broadcast %73 : vector<1x450xf32> to vector<8x450xf32>
    %75 = arith.mulf %72, %74 : vector<8x450xf32>
    %cst_51 = arith.constant dense<0.000000e+00> : vector<8xf32>
    %76 = vector.multi_reduction <add>, %75, %cst_51 [1] : vector<8x450xf32> to vector<8xf32>
    %77 = vector.shape_cast %76 : vector<8xf32> to vector<8x1xf32>
    %78 = arith.addf %67, %77 : vector<8x1xf32>
    %79 = arith.mulf %75, %75 : vector<8x450xf32>
    %cst_52 = arith.constant dense<0.000000e+00> : vector<8xf32>
    %80 = vector.multi_reduction <add>, %79, %cst_52 [1] : vector<8x450xf32> to vector<8xf32>
    %81 = vector.shape_cast %80 : vector<8xf32> to vector<8x1xf32>
    %82 = arith.addf %71, %81 : vector<8x1xf32>
    %83 = vector.extract_strided_slice %47 {offsets = [24, 0], sizes = [8, 450], strides = [1, 1]} : vector<32x450xf32> to vector<8x450xf32>
    %c3_53 = arith.constant 3 : index
    %c0_54 = arith.constant 0 : index
    %84 = vector.load %arg3[%c3_53, %c0_54] : memref<4x450xf32, #tpu.memory_space<vmem>>, vector<1x450xf32>
    %85 = vector.broadcast %84 : vector<1x450xf32> to vector<8x450xf32>
    %86 = arith.mulf %83, %85 : vector<8x450xf32>
    %cst_55 = arith.constant dense<0.000000e+00> : vector<8xf32>
    %87 = vector.multi_reduction <add>, %86, %cst_55 [1] : vector<8x450xf32> to vector<8xf32>
    %88 = vector.shape_cast %87 : vector<8xf32> to vector<8x1xf32>
    %89 = arith.addf %78, %88 : vector<8x1xf32>
    %90 = arith.mulf %86, %86 : vector<8x450xf32>
    %cst_56 = arith.constant dense<0.000000e+00> : vector<8xf32>
    %91 = vector.multi_reduction <add>, %90, %cst_56 [1] : vector<8x450xf32> to vector<8xf32>
    %92 = vector.shape_cast %91 : vector<8xf32> to vector<8x1xf32>
    %93 = arith.addf %82, %92 : vector<8x1xf32>
    %cst_57 = arith.constant 5.55555569E-4 : f32
    %94 = vector.broadcast %cst_57 : f32 to vector<8x1xf32>
    %95 = arith.mulf %89, %94 : vector<8x1xf32>
    %cst_58 = arith.constant 5.55555569E-4 : f32
    %96 = vector.broadcast %cst_58 : f32 to vector<8x1xf32>
    %97 = arith.mulf %93, %96 : vector<8x1xf32>
    %98 = arith.mulf %95, %95 : vector<8x1xf32>
    %99 = arith.subf %97, %98 : vector<8x1xf32>
    %c0_59 = arith.constant 0 : index
    %c0_60 = arith.constant 0 : index
    %100 = vector.load %arg4[%c0_59, %c0_60] : memref<8x1xf32, #tpu.memory_space<vmem>>, vector<8x1xf32>
    %cst_61 = arith.constant 9.99999974E-6 : f32
    %101 = vector.broadcast %cst_61 : f32 to vector<8x1xf32>
    %102 = arith.addf %99, %101 : vector<8x1xf32>
    %103 = math.rsqrt %102 : vector<8x1xf32>
    %104 = arith.mulf %100, %103 : vector<8x1xf32>
    %c0_62 = arith.constant 0 : index
    %c0_63 = arith.constant 0 : index
    %105 = vector.load %arg5[%c0_62, %c0_63] : memref<8x1xf32, #tpu.memory_space<vmem>>, vector<8x1xf32>
    %106 = arith.mulf %95, %104 : vector<8x1xf32>
    %107 = arith.subf %105, %106 : vector<8x1xf32>
    %108 = vector.extract_strided_slice %47 {offsets = [0, 0], sizes = [8, 450], strides = [1, 1]} : vector<32x450xf32> to vector<8x450xf32>
    %109 = vector.broadcast %104 : vector<8x1xf32> to vector<8x450xf32>
    %110 = arith.mulf %108, %109 : vector<8x450xf32>
    %111 = vector.broadcast %107 : vector<8x1xf32> to vector<8x450xf32>
    %112 = arith.addf %110, %111 : vector<8x450xf32>
    %cst_64 = arith.constant 0.000000e+00 : f32
    %113 = vector.broadcast %cst_64 : f32 to vector<8x450xf32>
    %114 = arith.maximumf %112, %113 : vector<8x450xf32>
    %c0_65 = arith.constant 0 : index
    %c0_66 = arith.constant 0 : index
    %115 = vector.load %arg6[%c0_65, %c0_66] : memref<32x450xf32, #tpu.memory_space<vmem>>, vector<8x450xf32>
    tpu.vector_store %arg6[%c0_65, %c0_66], %114 {strides = array<i32>} : memref<32x450xf32, #tpu.memory_space<vmem>>, vector<8x450xf32>,
    %116 = vector.extract_strided_slice %47 {offsets = [8, 0], sizes = [8, 450], strides = [1, 1]} : vector<32x450xf32> to vector<8x450xf32>
    %117 = vector.broadcast %104 : vector<8x1xf32> to vector<8x450xf32>
    %118 = arith.mulf %116, %117 : vector<8x450xf32>
    %119 = vector.broadcast %107 : vector<8x1xf32> to vector<8x450xf32>
    %120 = arith.addf %118, %119 : vector<8x450xf32>
    %cst_67 = arith.constant 0.000000e+00 : f32
    %121 = vector.broadcast %cst_67 : f32 to vector<8x450xf32>
    %122 = arith.maximumf %120, %121 : vector<8x450xf32>
    %c8_68 = arith.constant 8 : index
    %c0_69 = arith.constant 0 : index
    %123 = vector.load %arg6[%c8_68, %c0_69] : memref<32x450xf32, #tpu.memory_space<vmem>>, vector<8x450xf32>
    tpu.vector_store %arg6[%c8_68, %c0_69], %122 {strides = array<i32>} : memref<32x450xf32, #tpu.memory_space<vmem>>, vector<8x450xf32>,
    %124 = vector.extract_strided_slice %47 {offsets = [16, 0], sizes = [8, 450], strides = [1, 1]} : vector<32x450xf32> to vector<8x450xf32>
    %125 = vector.broadcast %104 : vector<8x1xf32> to vector<8x450xf32>
    %126 = arith.mulf %124, %125 : vector<8x450xf32>
    %127 = vector.broadcast %107 : vector<8x1xf32> to vector<8x450xf32>
    %128 = arith.addf %126, %127 : vector<8x450xf32>
    %cst_70 = arith.constant 0.000000e+00 : f32
    %129 = vector.broadcast %cst_70 : f32 to vector<8x450xf32>
    %130 = arith.maximumf %128, %129 : vector<8x450xf32>
    %c16_71 = arith.constant 16 : index
    %c0_72 = arith.constant 0 : index
    %131 = vector.load %arg6[%c16_71, %c0_72] : memref<32x450xf32, #tpu.memory_space<vmem>>, vector<8x450xf32>
    tpu.vector_store %arg6[%c16_71, %c0_72], %130 {strides = array<i32>} : memref<32x450xf32, #tpu.memory_space<vmem>>, vector<8x450xf32>,
    %132 = vector.extract_strided_slice %47 {offsets = [24, 0], sizes = [8, 450], strides = [1, 1]} : vector<32x450xf32> to vector<8x450xf32>
    %133 = vector.broadcast %104 : vector<8x1xf32> to vector<8x450xf32>
    %134 = arith.mulf %132, %133 : vector<8x450xf32>
    %135 = vector.broadcast %107 : vector<8x1xf32> to vector<8x450xf32>
    %136 = arith.addf %134, %135 : vector<8x450xf32>
    %cst_73 = arith.constant 0.000000e+00 : f32
    %137 = vector.broadcast %cst_73 : f32 to vector<8x450xf32>
    %138 = arith.maximumf %136, %137 : vector<8x450xf32>
    %c24_74 = arith.constant 24 : index
    %c0_75 = arith.constant 0 : index
    %139 = vector.load %arg6[%c24_74, %c0_75] : memref<32x450xf32, #tpu.memory_space<vmem>>, vector<8x450xf32>
    tpu.vector_store %arg6[%c24_74, %c0_75], %138 {strides = array<i32>} : memref<32x450xf32, #tpu.memory_space<vmem>>, vector<8x450xf32>,
    return
  }
}

</mosaic_0001>

<llo_original>
// kernel: simple_gudi_upconv_block.1
$region0: #{simple_gudi_upconv_block.1}
  #allocation0 [shape = 'u32[]', space=smem, size = 0x4, offset = 0x4, fixed_abs, tag = 'smem constant byte address 0x4 - core index']
  #allocation1 [shape = 'u32[72,128]{1,0:T(1,128)}', space=vmem, size = 0x9000, scoped, tag = 'internal scratch']
  #allocation2 [shape = 'f32[36,450]{1,0:T(8,128)}', space=vmem, size = 0x14000, scoped, tag = 'scratch operand']
  %s0 = inlined_call_operand.vmem [shape: f32[4,482], index: 0, kind: input, shape index: {}]
  %s1 = inlined_call_operand.vmem [shape: f32[32,36], index: 1, kind: input, shape index: {}]
  %s2 = inlined_call_operand.vmem [shape: f32[9,450], index: 2, kind: input, shape index: {}]
  %s3 = inlined_call_operand.vmem [shape: f32[4,450], index: 3, kind: input, shape index: {}]
  %s4 = inlined_call_operand.vmem [shape: f32[8,1], index: 4, kind: input, shape index: {}]
  %s5 = inlined_call_operand.vmem [shape: f32[8,1], index: 5, kind: input, shape index: {}]
  %s6 = inlined_call_operand.vmem [shape: f32[32,450], index: 6, kind: output, shape index: {}]
  %s7 = sld [smem:[#allocation0]]
  $region34: #{simple_gudi_upconv_block.1} parent=0
    _
  %s9 = ssub.s32 1, %s7
  %s10 = scalar_select 0, %s9, %s7
  // Predicated region
  $region2: #{simple_gudi_upconv_block.1} parent=0 // pred_check
    _
  $region3: #{simple_gudi_upconv_block.1} parent=0 // pred_check_branch
    %12 = sbr.rel (0) target = $region5
  $region4: #{simple_gudi_upconv_block.1} parent=0 // pred_region
    _
  $region5: #{simple_gudi_upconv_block.1} parent=0 // pred_fallthru
    _
  // Predicated region
  $region6: #{simple_gudi_upconv_block.1} parent=0 // pred_check
    _
  $region7: #{simple_gudi_upconv_block.1} parent=0 // pred_check_branch
    %14 = sbr.rel (0) target = $region9
  $region8: #{simple_gudi_upconv_block.1} parent=0 // pred_region
    _
  $region9: #{simple_gudi_upconv_block.1} parent=0 // pred_fallthru
    _
  // Predicated region
  $region10: #{simple_gudi_upconv_block.1} parent=0 // pred_check
    _
  $region11: #{simple_gudi_upconv_block.1} parent=0 // pred_check_branch
    %16 = sbr.rel (0) target = $region13
  $region12: #{simple_gudi_upconv_block.1} parent=0 // pred_region
    _
  $region13: #{simple_gudi_upconv_block.1} parent=0 // pred_fallthru
    _
  // Predicated region
  $region14: #{simple_gudi_upconv_block.1} parent=0 // pred_check
    _
  $region15: #{simple_gudi_upconv_block.1} parent=0 // pred_check_branch
    %18 = sbr.rel (0) target = $region17
  $region16: #{simple_gudi_upconv_block.1} parent=0 // pred_region
    _
  $region17: #{simple_gudi_upconv_block.1} parent=0 // pred_fallthru
    _
  // Predicated region
  $region18: #{simple_gudi_upconv_block.1} parent=0 // pred_check
    _
  $region19: #{simple_gudi_upconv_block.1} parent=0 // pred_check_branch
    %20 = sbr.rel (0) target = $region21
  $region20: #{simple_gudi_upconv_block.1} parent=0 // pred_region
    _
  $region21: #{simple_gudi_upconv_block.1} parent=0 // pred_fallthru
    _
  // Predicated region
  $region22: #{simple_gudi_upconv_block.1} parent=0 // pred_check
    _
  $region23: #{simple_gudi_upconv_block.1} parent=0 // pred_check_branch
    %22 = sbr.rel (0) target = $region25
  $region24: #{simple_gudi_upconv_block.1} parent=0 // pred_region
    _
  $region25: #{simple_gudi_upconv_block.1} parent=0 // pred_fallthru
    _
  %v23 = vld [vmem:[%s0] sm:$0xff]
  %v24 = vld [vmem:[%s0 + $0x8] sm:$0xff]
  %v25 = vld [vmem:[%s2] ss:$8 sm:$0xf]
  %v27 = vperm.slane %v25, 0
  %v28 = vperm.slane %v25, 1
  %v29 = vperm.slane %v25, 2
  %v30 = vperm.slane %v25, 3
  %v31 = vrot.slane %v28, 4
  %v32 = vrot.slane %v30, 4
  %vm33 = vcmask 1043456
  %v34 = vsel %vm33, %v27, %v31
  %v35 = vsel %vm33, %v29, %v32
  %v38 = vmul.f32 %v23, %v34
  %v39 = vmul.f32 %v24, %v35
  %42 = vst [vmem:[#allocation1] ss:$2 sm:$0xff] %v38
  %s43 = scalar_lea.vmem [#allocation1], 16
  %44 = vst [vmem:[%s43] ss:$2 sm:$0xff] %v39
  %v45 = vld.sshfl [vmem:[#allocation1] sm:$0xff pattern:$0x75316420]
  %v46 = vld.sshfl [vmem:[#allocation1 + $0x8] sm:$0xff pattern:$0x75316420]
  %v47 = vld.sshfl [vmem:[#allocation1 + $0x10] sm:$0xff pattern:$0x75316420]
  %v48 = vld.sshfl [vmem:[#allocation1 + $0x18] sm:$0xff pattern:$0x75316420]
  %53 = vst [vmem:[#allocation2] sm:$0xf] %v45
  %54 = vst [vmem:[#allocation2 + $0x8] sm:$0xf] %v46
  %55 = vst [vmem:[#allocation2 + $0x10] sm:$0xf] %v47
  %vm56 = vcmask 535552
  %57 = vst.msk [vmem:[#allocation2 + $0x18] sm:$0xf] %vm56, %v48
  %v58 = vld [vmem:[%s0] sm:$0xff]
  %v59 = vld [vmem:[%s0 + $0x8] sm:$0xff]
  %s60 = scalar_lea.vmem %s2, 1
  %v61 = vld [vmem:[%s60] ss:$8 sm:$0xf]
  %v63 = vperm.slane %v61, 0
  %v64 = vperm.slane %v61, 1
  %v65 = vperm.slane %v61, 2
  %v66 = vperm.slane %v61, 3
  %v67 = vrot.slane %v64, 4
  %v68 = vrot.slane %v66, 4
  %v69 = vsel %vm33, %v63, %v67
  %v70 = vsel %vm33, %v65, %v68
  %71 = vrot.lane.b32.xlu0 %v69, 1
  %v72 = vpop.permute.xlu0 %71
  %73 = vrot.lane.b32.xlu0 %v70, 1
  %v74 = vpop.permute.xlu0 %73
  %v75 = vrot.slane %v72, 4
  %v76 = vrot.slane %v74, 4
  %vm77 = vcmask 7168
  %v78 = vsel %vm77, %v75, %v72
  %v79 = vsel %vm33, %v75, %v76
  %v80 = vsel %vm77, %v79, %v74
  %v83 = vmul.f32 %v58, %v78
  %v84 = vmul.f32 %v59, %v80
  %s87 = scalar_lea.vmem [#allocation1], 1
  %88 = vst [vmem:[%s87] ss:$2 sm:$0xff] %v83
  %s89 = scalar_lea.vmem [#allocation1], 17
  %90 = vst [vmem:[%s89] ss:$2 sm:$0xff] %v84
  %v91 = vld.sshfl [vmem:[#allocation1] sm:$0xff pattern:$0x75316420]
  %v92 = vld.sshfl [vmem:[#allocation1 + $0x8] sm:$0xff pattern:$0x75316420]
  %v93 = vld.sshfl [vmem:[#allocation1 + $0x10] sm:$0xff pattern:$0x75316420]
  %v94 = vld.sshfl [vmem:[#allocation1 + $0x18] sm:$0xff pattern:$0x75316420]
  %95 = vrot.lane.b32.xlu0 %v91, 127
  %v96 = vpop.permute.xlu0 %95
  %97 = vrot.lane.b32.xlu0 %v92, 127
  %v98 = vpop.permute.xlu0 %97
  %99 = vrot.lane.b32.xlu0 %v93, 127
  %v100 = vpop.permute.xlu0 %99
  %101 = vrot.lane.b32.xlu0 %v94, 127
  %v102 = vpop.permute.xlu0 %101
  %vm103 = vcmask 1039360
  %v104 = vsel %vm103, %v96, %v98
  %v105 = vsel %vm103, %v98, %v100
  %v106 = vsel %vm103, %v100, %v102
  %111 = vst [vmem:[#allocation2] sm:$0xf0] %v104
  %112 = vst [vmem:[#allocation2 + $0x8] sm:$0xf0] %v105
  %113 = vst [vmem:[#allocation2 + $0x10] sm:$0xf0] %v106
  %vm114 = vcmask 539652
  %115 = vst.msk [vmem:[#allocation2 + $0x18] sm:$0xf0] %vm114, %v102
  %v116 = vld [vmem:[%s0] sm:$0xff]
  %v117 = vld [vmem:[%s0 + $0x8] sm:$0xff]
  %s118 = scalar_lea.vmem %s2, 2
  %v119 = vld [vmem:[%s118] ss:$8 sm:$0xf]
  %v121 = vperm.slane %v119, 0
  %v122 = vperm.slane %v119, 1
  %v123 = vperm.slane %v119, 2
  %v124 = vperm.slane %v119, 3
  %v125 = vrot.slane %v122, 4
  %v126 = vrot.slane %v124, 4
  %v127 = vsel %vm33, %v121, %v125
  %v128 = vsel %vm33, %v123, %v126
  %129 = vrot.lane.b32.xlu0 %v127, 2
  %v130 = vpop.permute.xlu0 %129
  %131 = vrot.lane.b32.xlu0 %v128, 2
  %v132 = vpop.permute.xlu0 %131
  %v133 = vrot.slane %v130, 4
  %v134 = vrot.slane %v132, 4
  %vm135 = vcmask 15360
  %v136 = vsel %vm135, %v133, %v130
  %v137 = vsel %vm33, %v133, %v134
  %v138 = vsel %vm135, %v137, %v132
  %v141 = vmul.f32 %v116, %v136
  %v142 = vmul.f32 %v117, %v138
  %145 = vst [vmem:[#allocation1] ss:$2 sm:$0xff] %v141
  %s146 = scalar_lea.vmem [#allocation1], 16
  %147 = vst [vmem:[%s146] ss:$2 sm:$0xff] %v142
  %v148 = vld.sshfl [vmem:[#allocation1] sm:$0xff pattern:$0x75316420]
  %v149 = vld.sshfl [vmem:[#allocation1 + $0x8] sm:$0xff pattern:$0x75316420]
  %v150 = vld.sshfl [vmem:[#allocation1 + $0x10] sm:$0xff pattern:$0x75316420]
  %v151 = vld.sshfl [vmem:[#allocation1 + $0x18] sm:$0xff pattern:$0x75316420]
  %152 = vrot.lane.b32.xlu0 %v148, 126
  %v153 = vpop.permute.xlu0 %152
  %154 = vrot.lane.b32.xlu0 %v149, 126
  %v155 = vpop.permute.xlu0 %154
  %156 = vrot.lane.b32.xlu0 %v150, 126
  %v157 = vpop.permute.xlu0 %156
  %158 = vrot.lane.b32.xlu0 %v151, 126
  %v159 = vpop.permute.xlu0 %158
  %vm160 = vcmask 1031168
  %v161 = vsel %vm160, %v153, %v155
  %v162 = vsel %vm160, %v155, %v157
  %v163 = vsel %vm160, %v157, %v159
  %168 = vst [vmem:[#allocation2 + $0x20] sm:$0xf] %v161
  %169 = vst [vmem:[#allocation2 + $0x28] sm:$0xf] %v162
  %170 = vst [vmem:[#allocation2 + $0x30] sm:$0xf] %v163
  %171 = vst.msk [vmem:[#allocation2 + $0x38] sm:$0xf] %vm56, %v159
  %v172 = vld [vmem:[%s0] sm:$0xff]
  %v173 = vld [vmem:[%s0 + $0x8] sm:$0xff]
  %s174 = scalar_lea.vmem %s2, 3
  %v175 = vld [vmem:[%s174] ss:$8 sm:$0xf]
  %v177 = vperm.slane %v175, 0
  %v178 = vperm.slane %v175, 1
  %v179 = vperm.slane %v175, 2
  %v180 = vperm.slane %v175, 3
  %v181 = vrot.slane %v178, 4
  %v182 = vrot.slane %v180, 4
  %v183 = vsel %vm33, %v177, %v181
  %v184 = vsel %vm33, %v179, %v182
  %185 = vrot.lane.b32.xlu0 %v183, 15
  %v186 = vpop.permute.xlu0 %185
  %187 = vrot.lane.b32.xlu0 %v184, 15
  %v188 = vpop.permute.xlu0 %187
  %v189 = vrot.slane %v186, 4
  %v190 = vrot.slane %v188, 4
  %vm191 = vcmask 121856
  %v192 = vsel %vm191, %v189, %v186
  %v193 = vsel %vm33, %v189, %v190
  %v194 = vsel %vm191, %v193, %v188
  %v197 = vmul.f32 %v172, %v192
  %v198 = vmul.f32 %v173, %v194
  %s201 = scalar_lea.vmem [#allocation1], 1
  %202 = vst [vmem:[%s201] ss:$2 sm:$0xff] %v197
  %s203 = scalar_lea.vmem [#allocation1], 17
  %204 = vst [vmem:[%s203] ss:$2 sm:$0xff] %v198
  %v205 = vld.sshfl [vmem:[#allocation1] sm:$0xff pattern:$0x75316420]
  %v206 = vld.sshfl [vmem:[#allocation1 + $0x8] sm:$0xff pattern:$0x75316420]
  %v207 = vld.sshfl [vmem:[#allocation1 + $0x10] sm:$0xff pattern:$0x75316420]
  %v208 = vld.sshfl [vmem:[#allocation1 + $0x18] sm:$0xff pattern:$0x75316420]
  %209 = vrot.lane.b32.xlu0 %v205, 113
  %v210 = vpop.permute.xlu0 %209
  %211 = vrot.lane.b32.xlu0 %v206, 113
  %v212 = vpop.permute.xlu0 %211
  %213 = vrot.lane.b32.xlu0 %v207, 113
  %v214 = vpop.permute.xlu0 %213
  %215 = vrot.lane.b32.xlu0 %v208, 113
  %v216 = vpop.permute.xlu0 %215
  %vm217 = vcmask 924672
  %v218 = vsel %vm217, %v210, %v212
  %v219 = vsel %vm217, %v212, %v214
  %v220 = vsel %vm217, %v214, %v216
  %225 = vst [vmem:[#allocation2 + $0x20] sm:$0xf0] %v218
  %226 = vst [vmem:[#allocation2 + $0x28] sm:$0xf0] %v219
  %227 = vst [vmem:[#allocation2 + $0x30] sm:$0xf0] %v220
  %228 = vst.msk [vmem:[#allocation2 + $0x38] sm:$0xf0] %vm114, %v216
  %v229 = vld [vmem:[%s0] sm:$0xff]
  %v230 = vld [vmem:[%s0 + $0x8] sm:$0xff]
  %s231 = scalar_lea.vmem %s2, 4
  %v232 = vld [vmem:[%s231] ss:$8 sm:$0xf]
  %v234 = vperm.slane %v232, 0
  %v235 = vperm.slane %v232, 1
  %v236 = vperm.slane %v232, 2
  %v237 = vperm.slane %v232, 3
  %v238 = vrot.slane %v235, 4
  %v239 = vrot.slane %v237, 4
  %v240 = vsel %vm33, %v234, %v238
  %v241 = vsel %vm33, %v236, %v239
  %242 = vrot.lane.b32.xlu0 %v240, 16
  %v243 = vpop.permute.xlu0 %242
  %244 = vrot.lane.b32.xlu0 %v241, 16
  %v245 = vpop.permute.xlu0 %244
  %v246 = vrot.slane %v243, 4
  %v247 = vrot.slane %v245, 4
  %vm248 = vcmask 130048
  %v249 = vsel %vm248, %v246, %v243
  %v250 = vsel %vm33, %v246, %v247
  %v251 = vsel %vm248, %v250, %v245
  %v254 = vmul.f32 %v229, %v249
  %v255 = vmul.f32 %v230, %v251
  %258 = vst [vmem:[#allocation1] ss:$2 sm:$0xff] %v254
  %s259 = scalar_lea.vmem [#allocation1], 16
  %260 = vst [vmem:[%s259] ss:$2 sm:$0xff] %v255
  %v261 = vld.sshfl [vmem:[#allocation1] sm:$0xff pattern:$0x75316420]
  %v262 = vld.sshfl [vmem:[#allocation1 + $0x8] sm:$0xff pattern:$0x75316420]
  %v263 = vld.sshfl [vmem:[#allocation1 + $0x10] sm:$0xff pattern:$0x75316420]
  %v264 = vld.sshfl [vmem:[#allocation1 + $0x18] sm:$0xff pattern:$0x75316420]
  %265 = vrot.lane.b32.xlu0 %v261, 112
  %v266 = vpop.permute.xlu0 %265
  %267 = vrot.lane.b32.xlu0 %v262, 112
  %v268 = vpop.permute.xlu0 %267
  %269 = vrot.lane.b32.xlu0 %v263, 112
  %v270 = vpop.permute.xlu0 %269
  %271 = vrot.lane.b32.xlu0 %v264, 112
  %v272 = vpop.permute.xlu0 %271
  %vm273 = vcmask 916480
  %v274 = vsel %vm273, %v266, %v268
  %v275 = vsel %vm273, %v268, %v270
  %v276 = vsel %vm273, %v270, %v272
  %281 = vst [vmem:[#allocation2 + $0x40] sm:$0xf] %v274
  %282 = vst [vmem:[#allocation2 + $0x48] sm:$0xf] %v275
  %283 = vst [vmem:[#allocation2 + $0x50] sm:$0xf] %v276
  %284 = vst.msk [vmem:[#allocation2 + $0x58] sm:$0xf] %vm56, %v272
  %v285 = vld [vmem:[%s0] sm:$0xff]
  %v286 = vld [vmem:[%s0 + $0x8] sm:$0xff]
  %s287 = scalar_lea.vmem %s2, 5
  %v288 = vld [vmem:[%s287] ss:$8 sm:$0xf]
  %v290 = vperm.slane %v288, 0
  %v291 = vperm.slane %v288, 1
  %v292 = vperm.slane %v288, 2
  %v293 = vperm.slane %v288, 3
  %v294 = vrot.slane %v291, 4
  %v295 = vrot.slane %v293, 4
  %v296 = vsel %vm33, %v290, %v294
  %v297 = vsel %vm33, %v292, %v295
  %298 = vrot.lane.b32.xlu0 %v296, 17
  %v299 = vpop.permute.xlu0 %298
  %300 = vrot.lane.b32.xlu0 %v297, 17
  %v301 = vpop.permute.xlu0 %300
  %v302 = vrot.slane %v299, 4
  %v303 = vrot.slane %v301, 4
  %vm304 = vcmask 138240
  %v305 = vsel %vm304, %v302, %v299
  %v306 = vsel %vm33, %v302, %v303
  %v307 = vsel %vm304, %v306, %v301
  %v310 = vmul.f32 %v285, %v305
  %v311 = vmul.f32 %v286, %v307
  %s314 = scalar_lea.vmem [#allocation1], 1
  %315 = vst [vmem:[%s314] ss:$2 sm:$0xff] %v310
  %s316 = scalar_lea.vmem [#allocation1], 17
  %317 = vst [vmem:[%s316] ss:$2 sm:$0xff] %v311
  %v318 = vld.sshfl [vmem:[#allocation1] sm:$0xff pattern:$0x75316420]
  %v319 = vld.sshfl [vmem:[#allocation1 + $0x8] sm:$0xff pattern:$0x75316420]
  %v320 = vld.sshfl [vmem:[#allocation1 + $0x10] sm:$0xff pattern:$0x75316420]
  %v321 = vld.sshfl [vmem:[#allocation1 + $0x18] sm:$0xff pattern:$0x75316420]
  %322 = vrot.lane.b32.xlu0 %v318, 111
  %v323 = vpop.permute.xlu0 %322
  %324 = vrot.lane.b32.xlu0 %v319, 111
  %v325 = vpop.permute.xlu0 %324
  %326 = vrot.lane.b32.xlu0 %v320, 111
  %v327 = vpop.permute.xlu0 %326
  %328 = vrot.lane.b32.xlu0 %v321, 111
  %v329 = vpop.permute.xlu0 %328
  %vm330 = vcmask 908288
  %v331 = vsel %vm330, %v323, %v325
  %v332 = vsel %vm330, %v325, %v327
  %v333 = vsel %vm330, %v327, %v329
  %338 = vst [vmem:[#allocation2 + $0x40] sm:$0xf0] %v331
  %339 = vst [vmem:[#allocation2 + $0x48] sm:$0xf0] %v332
  %340 = vst [vmem:[#allocation2 + $0x50] sm:$0xf0] %v333
  %341 = vst.msk [vmem:[#allocation2 + $0x58] sm:$0xf0] %vm114, %v329
  %v342 = vld [vmem:[%s0] sm:$0xff]
  %v343 = vld [vmem:[%s0 + $0x8] sm:$0xff]
  %s344 = scalar_lea.vmem %s2, 6
  %v345 = vld [vmem:[%s344] ss:$8 sm:$0xf]
  %v347 = vperm.slane %v345, 0
  %v348 = vperm.slane %v345, 1
  %v349 = vperm.slane %v345, 2
  %v350 = vperm.slane %v345, 3
  %v351 = vrot.slane %v348, 4
  %v352 = vrot.slane %v350, 4
  %v353 = vsel %vm33, %v347, %v351
  %v354 = vsel %vm33, %v349, %v352
  %355 = vrot.lane.b32.xlu0 %v353, 30
  %v356 = vpop.permute.xlu0 %355
  %357 = vrot.lane.b32.xlu0 %v354, 30
  %v358 = vpop.permute.xlu0 %357
  %v359 = vrot.slane %v356, 4
  %v360 = vrot.slane %v358, 4
  %vm361 = vcmask 244736
  %v362 = vsel %vm361, %v359, %v356
  %v363 = vsel %vm33, %v359, %v360
  %v364 = vsel %vm361, %v363, %v358
  %v367 = vmul.f32 %v342, %v362
  %v368 = vmul.f32 %v343, %v364
  %371 = vst [vmem:[#allocation1] ss:$2 sm:$0xff] %v367
  %s372 = scalar_lea.vmem [#allocation1], 16
  %373 = vst [vmem:[%s372] ss:$2 sm:$0xff] %v368
  %v374 = vld.sshfl [vmem:[#allocation1] sm:$0xff pattern:$0x75316420]
  %v375 = vld.sshfl [vmem:[#allocation1 + $0x8] sm:$0xff pattern:$0x75316420]
  %v376 = vld.sshfl [vmem:[#allocation1 + $0x10] sm:$0xff pattern:$0x75316420]
  %v377 = vld.sshfl [vmem:[#allocation1 + $0x18] sm:$0xff pattern:$0x75316420]
  %378 = vrot.lane.b32.xlu0 %v374, 98
  %v379 = vpop.permute.xlu0 %378
  %380 = vrot.lane.b32.xlu0 %v375, 98
  %v381 = vpop.permute.xlu0 %380
  %382 = vrot.lane.b32.xlu0 %v376, 98
  %v383 = vpop.permute.xlu0 %382
  %384 = vrot.lane.b32.xlu0 %v377, 98
  %v385 = vpop.permute.xlu0 %384
  %vm386 = vcmask 801792
  %v387 = vsel %vm386, %v379, %v381
  %v388 = vsel %vm386, %v381, %v383
  %v389 = vsel %vm386, %v383, %v385
  %394 = vst [vmem:[#allocation2 + $0x60] sm:$0xf] %v387
  %395 = vst [vmem:[#allocation2 + $0x68] sm:$0xf] %v388
  %396 = vst [vmem:[#allocation2 + $0x70] sm:$0xf] %v389
  %397 = vst.msk [vmem:[#allocation2 + $0x78] sm:$0xf] %vm56, %v385
  %v398 = vld [vmem:[%s0] sm:$0xff]
  %v399 = vld [vmem:[%s0 + $0x8] sm:$0xff]
  %s400 = scalar_lea.vmem %s2, 7
  %v401 = vld [vmem:[%s400] ss:$8 sm:$0xf]
  %v403 = vperm.slane %v401, 0
  %v404 = vperm.slane %v401, 1
  %v405 = vperm.slane %v401, 2
  %v406 = vperm.slane %v401, 3
  %v407 = vrot.slane %v404, 4
  %v408 = vrot.slane %v406, 4
  %v409 = vsel %vm33, %v403, %v407
  %v410 = vsel %vm33, %v405, %v408
  %411 = vrot.lane.b32.xlu0 %v409, 31
  %v412 = vpop.permute.xlu0 %411
  %413 = vrot.lane.b32.xlu0 %v410, 31
  %v414 = vpop.permute.xlu0 %413
  %v415 = vrot.slane %v412, 4
  %v416 = vrot.slane %v414, 4
  %vm417 = vcmask 252928
  %v418 = vsel %vm417, %v415, %v412
  %v419 = vsel %vm33, %v415, %v416
  %v420 = vsel %vm417, %v419, %v414
  %v423 = vmul.f32 %v398, %v418
  %v424 = vmul.f32 %v399, %v420
  %s427 = scalar_lea.vmem [#allocation1], 1
  %428 = vst [vmem:[%s427] ss:$2 sm:$0xff] %v423
  %s429 = scalar_lea.vmem [#allocation1], 17
  %430 = vst [vmem:[%s429] ss:$2 sm:$0xff] %v424
  %v431 = vld.sshfl [vmem:[#allocation1] sm:$0xff pattern:$0x75316420]
  %v432 = vld.sshfl [vmem:[#allocation1 + $0x8] sm:$0xff pattern:$0x75316420]
  %v433 = vld.sshfl [vmem:[#allocation1 + $0x10] sm:$0xff pattern:$0x75316420]
  %v434 = vld.sshfl [vmem:[#allocation1 + $0x18] sm:$0xff pattern:$0x75316420]
  %435 = vrot.lane.b32.xlu0 %v431, 97
  %v436 = vpop.permute.xlu0 %435
  %437 = vrot.lane.b32.xlu0 %v432, 97
  %v438 = vpop.permute.xlu0 %437
  %439 = vrot.lane.b32.xlu0 %v433, 97
  %v440 = vpop.permute.xlu0 %439
  %441 = vrot.lane.b32.xlu0 %v434, 97
  %v442 = vpop.permute.xlu0 %441
  %vm443 = vcmask 793600
  %v444 = vsel %vm443, %v436, %v438
  %v445 = vsel %vm443, %v438, %v440
  %v446 = vsel %vm443, %v440, %v442
  %451 = vst [vmem:[#allocation2 + $0x60] sm:$0xf0] %v444
  %452 = vst [vmem:[#allocation2 + $0x68] sm:$0xf0] %v445
  %453 = vst [vmem:[#allocation2 + $0x70] sm:$0xf0] %v446
  %454 = vst.msk [vmem:[#allocation2 + $0x78] sm:$0xf0] %vm114, %v442
  %v455 = vld [vmem:[%s0] sm:$0xff]
  %v456 = vld [vmem:[%s0 + $0x8] sm:$0xff]
  %s457 = scalar_lea.vmem %s2, 32
  %v458 = vld [vmem:[%s457] ss:$8 sm:$0xf]
  %v460 = vperm.slane %v458, 0
  %v461 = vperm.slane %v458, 1
  %v462 = vperm.slane %v458, 2
  %v463 = vperm.slane %v458, 3
  %v464 = vrot.slane %v461, 4
  %v465 = vrot.slane %v463, 4
  %v466 = vsel %vm33, %v460, %v464
  %v467 = vsel %vm33, %v462, %v465
  %468 = vrot.lane.b32.xlu0 %v466, 32
  %v469 = vpop.permute.xlu0 %468
  %470 = vrot.lane.b32.xlu0 %v467, 32
  %v471 = vpop.permute.xlu0 %470
  %v472 = vrot.slane %v469, 4
  %v473 = vrot.slane %v471, 4
  %vm474 = vcmask 261120
  %v475 = vsel %vm474, %v472, %v469
  %v476 = vsel %vm33, %v472, %v473
  %v477 = vsel %vm474, %v476, %v471
  %v480 = vmul.f32 %v455, %v475
  %v481 = vmul.f32 %v456, %v477
  %484 = vst [vmem:[#allocation1] ss:$2 sm:$0xff] %v480
  %s485 = scalar_lea.vmem [#allocation1], 16
  %486 = vst [vmem:[%s485] ss:$2 sm:$0xff] %v481
  %v487 = vld.sshfl [vmem:[#allocation1] sm:$0xff pattern:$0x75316420]
  %v488 = vld.sshfl [vmem:[#allocation1 + $0x8] sm:$0xff pattern:$0x75316420]
  %v489 = vld.sshfl [vmem:[#allocation1 + $0x10] sm:$0xff pattern:$0x75316420]
  %v490 = vld.sshfl [vmem:[#allocation1 + $0x18] sm:$0xff pattern:$0x75316420]
  %491 = vrot.lane.b32.xlu0 %v487, 96
  %v492 = vpop.permute.xlu0 %491
  %493 = vrot.lane.b32.xlu0 %v488, 96
  %v494 = vpop.permute.xlu0 %493
  %495 = vrot.lane.b32.xlu0 %v489, 96
  %v496 = vpop.permute.xlu0 %495
  %497 = vrot.lane.b32.xlu0 %v490, 96
  %v498 = vpop.permute.xlu0 %497
  %vm499 = vcmask 785408
  %v500 = vsel %vm499, %v492, %v494
  %v501 = vsel %vm499, %v494, %v496
  %v502 = vsel %vm499, %v496, %v498
  %507 = vst [vmem:[#allocation2 + $0x80] sm:$0xf] %v500
  %508 = vst [vmem:[#allocation2 + $0x88] sm:$0xf] %v501
  %509 = vst [vmem:[#allocation2 + $0x90] sm:$0xf] %v502
  %510 = vst.msk [vmem:[#allocation2 + $0x98] sm:$0xf] %vm56, %v498
  %v511 = vld [vmem:[%s1] sm:$0xff]
  %v512 = vld [vmem:[%s1 + $0x8] sm:$0xff]
  %v513 = vld [vmem:[%s1 + $0x10] sm:$0xff]
  %v514 = vld [vmem:[%s1 + $0x18] sm:$0xff]
  %v515 = vld [vmem:[#allocation2] sm:$0xff]
  %v516 = vld [vmem:[#allocation2 + $0x8] sm:$0xff]
  %v517 = vld [vmem:[#allocation2 + $0x10] sm:$0xff]
  %v518 = vld [vmem:[#allocation2 + $0x18] sm:$0xff]
  %v519 = vld [vmem:[#allocation2 + $0x20] sm:$0xff]
  %v520 = vld [vmem:[#allocation2 + $0x28] sm:$0xff]
  %v521 = vld [vmem:[#allocation2 + $0x30] sm:$0xff]
  %v522 = vld [vmem:[#allocation2 + $0x38] sm:$0xff]
  %v523 = vld [vmem:[#allocation2 + $0x40] sm:$0xff]
  %v524 = vld [vmem:[#allocation2 + $0x48] sm:$0xff]
  %v525 = vld [vmem:[#allocation2 + $0x50] sm:$0xff]
  %v526 = vld [vmem:[#allocation2 + $0x58] sm:$0xff]
  %v527 = vld [vmem:[#allocation2 + $0x60] sm:$0xff]
  %v528 = vld [vmem:[#allocation2 + $0x68] sm:$0xff]
  %v529 = vld [vmem:[#allocation2 + $0x70] sm:$0xff]
  %v530 = vld [vmem:[#allocation2 + $0x78] sm:$0xff]
  %v531 = vld [vmem:[#allocation2 + $0x80] sm:$0xf]
  %v532 = vld [vmem:[#allocation2 + $0x88] sm:$0xf]
  %v533 = vld [vmem:[#allocation2 + $0x90] sm:$0xf]
  %v534 = vld [vmem:[#allocation2 + $0x98] sm:$0xf]
  %vm535 = vcmask 293888
  %v537 = vsel %vm535, %v511, 0
  %v540 = vsel %vm535, %v512, 0
  %v543 = vsel %vm535, %v513, 0
  %v546 = vsel %vm535, %v514, 0
  %v549 = vsel %vm33, %v531, 0
  %v552 = vsel %vm33, %v532, 0
  %v555 = vsel %vm33, %v533, 0
  %v558 = vsel %vm33, %v534, 0
  %560 = vmatpush.msra.mxu0 0.0
  %561 = vmatpush.msra.mxu0 0.0
  %562 = vmatpush.msra.mxu0 0.0
  %563 = vmatpush.msra.mxu0 0.0
  %564 = vmatpush.msra.mxu0 0.0
  %565 = vmatpush.msra.mxu0 0.0
  %566 = vmatpush.msra.mxu0 0.0
  %567 = vmatpush.msra.mxu0 0.0
  %568 = vmatpush.msra.mxu0 0.0
  %569 = vmatpush.msra.mxu0 0.0
  %570 = vmatpush.msra.mxu0 0.0
  %571 = vmatpush.msra.mxu0 %v549
  %572 = vmatpush.msra.mxu0 %v527
  %573 = vmatpush.msra.mxu0 %v523
  %574 = vmatpush.msra.mxu0 %v519
  %575 = vmatpush.msra.mxu0 %v515
  %576 = vmatmul.f32.gmra.mxu0 %v537
  %v577 = vpop.f32.mrf.mxu0
  %v578 = vadd.f32 0.0, %v577
  %579 = vmatmul.f32.gmra.mxu0 %v540
  %v580 = vpop.f32.mrf.mxu0
  %v581 = vadd.f32 0.0, %v580
  %582 = vmatmul.f32.gmra.mxu0 %v543
  %v583 = vpop.f32.mrf.mxu0
  %v584 = vadd.f32 0.0, %v583
  %585 = vmatmul.f32.gmra.mxu0 %v546
  %v586 = vpop.f32.mrf.mxu0
  %v587 = vadd.f32 0.0, %v586
  %588 = vdwg.mxu0
  %589 = vmatpush.msra.mxu0 0.0
  %590 = vmatpush.msra.mxu0 0.0
  %591 = vmatpush.msra.mxu0 0.0
  %592 = vmatpush.msra.mxu0 0.0
  %593 = vmatpush.msra.mxu0 0.0
  %594 = vmatpush.msra.mxu0 0.0
  %595 = vmatpush.msra.mxu0 0.0
  %596 = vmatpush.msra.mxu0 0.0
  %597 = vmatpush.msra.mxu0 0.0
  %598 = vmatpush.msra.mxu0 0.0
  %599 = vmatpush.msra.mxu0 0.0
  %600 = vmatpush.msra.mxu0 %v552
  %601 = vmatpush.msra.mxu0 %v528
  %602 = vmatpush.msra.mxu0 %v524
  %603 = vmatpush.msra.mxu0 %v520
  %604 = vmatpush.msra.mxu0 %v516
  %605 = vmatmul.f32.gmra.mxu0 %v537
  %v606 = vpop.f32.mrf.mxu0
  %v607 = vadd.f32 0.0, %v606
  %608 = vmatmul.f32.gmra.mxu0 %v540
  %v609 = vpop.f32.mrf.mxu0
  %v610 = vadd.f32 0.0, %v609
  %611 = vmatmul.f32.gmra.mxu0 %v543
  %v612 = vpop.f32.mrf.mxu0
  %v613 = vadd.f32 0.0, %v612
  %614 = vmatmul.f32.gmra.mxu0 %v546
  %v615 = vpop.f32.mrf.mxu0
  %v616 = vadd.f32 0.0, %v615
  %617 = vdwg.mxu0
  %618 = vmatpush.msra.mxu0 0.0
  %619 = vmatpush.msra.mxu0 0.0
  %620 = vmatpush.msra.mxu0 0.0
  %621 = vmatpush.msra.mxu0 0.0
  %622 = vmatpush.msra.mxu0 0.0
  %623 = vmatpush.msra.mxu0 0.0
  %624 = vmatpush.msra.mxu0 0.0
  %625 = vmatpush.msra.mxu0 0.0
  %626 = vmatpush.msra.mxu0 0.0
  %627 = vmatpush.msra.mxu0 0.0
  %628 = vmatpush.msra.mxu0 0.0
  %629 = vmatpush.msra.mxu0 %v555
  %630 = vmatpush.msra.mxu0 %v529
  %631 = vmatpush.msra.mxu0 %v525
  %632 = vmatpush.msra.mxu0 %v521
  %633 = vmatpush.msra.mxu0 %v517
  %634 = vmatmul.f32.gmra.mxu0 %v537
  %v635 = vpop.f32.mrf.mxu0
  %v636 = vadd.f32 0.0, %v635
  %637 = vmatmul.f32.gmra.mxu0 %v540
  %v638 = vpop.f32.mrf.mxu0
  %v639 = vadd.f32 0.0, %v638
  %640 = vmatmul.f32.gmra.mxu0 %v543
  %v641 = vpop.f32.mrf.mxu0
  %v642 = vadd.f32 0.0, %v641
  %643 = vmatmul.f32.gmra.mxu0 %v546
  %v644 = vpop.f32.mrf.mxu0
  %v645 = vadd.f32 0.0, %v644
  %646 = vdwg.mxu0
  %647 = vmatpush.msra.mxu0 0.0
  %648 = vmatpush.msra.mxu0 0.0
  %649 = vmatpush.msra.mxu0 0.0
  %650 = vmatpush.msra.mxu0 0.0
  %651 = vmatpush.msra.mxu0 0.0
  %652 = vmatpush.msra.mxu0 0.0
  %653 = vmatpush.msra.mxu0 0.0
  %654 = vmatpush.msra.mxu0 0.0
  %655 = vmatpush.msra.mxu0 0.0
  %656 = vmatpush.msra.mxu0 0.0
  %657 = vmatpush.msra.mxu0 0.0
  %658 = vmatpush.msra.mxu0 %v558
  %659 = vmatpush.msra.mxu0 %v530
  %660 = vmatpush.msra.mxu0 %v526
  %661 = vmatpush.msra.mxu0 %v522
  %662 = vmatpush.msra.mxu0 %v518
  %663 = vmatmul.f32.gmra.mxu0 %v537
  %v664 = vpop.f32.mrf.mxu0
  %v665 = vadd.f32 0.0, %v664
  %666 = vmatmul.f32.gmra.mxu0 %v540
  %v667 = vpop.f32.mrf.mxu0
  %v668 = vadd.f32 0.0, %v667
  %669 = vmatmul.f32.gmra.mxu0 %v543
  %v670 = vpop.f32.mrf.mxu0
  %v671 = vadd.f32 0.0, %v670
  %672 = vmatmul.f32.gmra.mxu0 %v546
  %v673 = vpop.f32.mrf.mxu0
  %v674 = vadd.f32 0.0, %v673
  %675 = vdwg.mxu0
  %v676 = vld [vmem:[%s3] ss:$4 sm:$0xf]
  %v678 = vperm.slane %v676, 0
  %v679 = vperm.slane %v676, 1
  %v680 = vperm.slane %v676, 2
  %v681 = vperm.slane %v676, 3
  %v686 = vmul.f32 %v578, %v678
  %v687 = vmul.f32 %v607, %v679
  %v688 = vmul.f32 %v636, %v680
  %v689 = vmul.f32 %v665, %v681
  %v690 = vadd.f32 %v686, %v687
  %v691 = vadd.f32 %v690, %v688
  %vm692 = vcmask 539648
  %v693 = vsel %vm692, %v689, 0.0
  %v694 = vadd.f32 %v691, %v693
  %695 = vadd.xlane.f32.xlu0 %v694
  %v696 = vpop.xlane.xlu0 %695
  %v697 = vadd.f32 %v696, 0.0
  %v698 = vmul.f32 %v686, %v686
  %v699 = vmul.f32 %v687, %v687
  %v700 = vmul.f32 %v688, %v688
  %v701 = vmul.f32 %v689, %v689
  %v702 = vadd.f32 %v698, %v699
  %v703 = vadd.f32 %v702, %v700
  %v704 = vsel %vm692, %v701, 0.0
  %v705 = vadd.f32 %v703, %v704
  %706 = vadd.xlane.f32.xlu0 %v705
  %v707 = vpop.xlane.xlu0 %706
  %v708 = vadd.f32 %v707, 0.0
  %s709 = scalar_lea.vmem %s3, 1
  %v710 = vld [vmem:[%s709] ss:$4 sm:$0xf]
  %v712 = vperm.slane %v710, 0
  %v713 = vperm.slane %v710, 1
  %v714 = vperm.slane %v710, 2
  %v715 = vperm.slane %v710, 3
  %v720 = vmul.f32 %v581, %v712
  %v721 = vmul.f32 %v610, %v713
  %v722 = vmul.f32 %v639, %v714
  %v723 = vmul.f32 %v668, %v715
  %v724 = vadd.f32 %v720, %v721
  %v725 = vadd.f32 %v724, %v722
  %v726 = vsel %vm692, %v723, 0.0
  %v727 = vadd.f32 %v725, %v726
  %728 = vadd.xlane.f32.xlu0 %v727
  %v729 = vpop.xlane.xlu0 %728
  %v730 = vadd.f32 %v697, %v729
  %v731 = vmul.f32 %v720, %v720
  %v732 = vmul.f32 %v721, %v721
  %v733 = vmul.f32 %v722, %v722
  %v734 = vmul.f32 %v723, %v723
  %v735 = vadd.f32 %v731, %v732
  %v736 = vadd.f32 %v735, %v733
  %v737 = vsel %vm692, %v734, 0.0
  %v738 = vadd.f32 %v736, %v737
  %739 = vadd.xlane.f32.xlu0 %v738
  %v740 = vpop.xlane.xlu0 %739
  %v741 = vadd.f32 %v708, %v740
  %s742 = scalar_lea.vmem %s3, 2
  %v743 = vld [vmem:[%s742] ss:$4 sm:$0xf]
  %v745 = vperm.slane %v743, 0
  %v746 = vperm.slane %v743, 1
  %v747 = vperm.slane %v743, 2
  %v748 = vperm.slane %v743, 3
  %v753 = vmul.f32 %v584, %v745
  %v754 = vmul.f32 %v613, %v746
  %v755 = vmul.f32 %v642, %v747
  %v756 = vmul.f32 %v671, %v748
  %v757 = vadd.f32 %v753, %v754
  %v758 = vadd.f32 %v757, %v755
  %v759 = vsel %vm692, %v756, 0.0
  %v760 = vadd.f32 %v758, %v759
  %761 = vadd.xlane.f32.xlu0 %v760
  %v762 = vpop.xlane.xlu0 %761
  %v763 = vadd.f32 %v730, %v762
  %v764 = vmul.f32 %v753, %v753
  %v765 = vmul.f32 %v754, %v754
  %v766 = vmul.f32 %v755, %v755
  %v767 = vmul.f32 %v756, %v756
  %v768 = vadd.f32 %v764, %v765
  %v769 = vadd.f32 %v768, %v766
  %v770 = vsel %vm692, %v767, 0.0
  %v771 = vadd.f32 %v769, %v770
  %772 = vadd.xlane.f32.xlu0 %v771
  %v773 = vpop.xlane.xlu0 %772
  %v774 = vadd.f32 %v741, %v773
  %s775 = scalar_lea.vmem %s3, 3
  %v776 = vld [vmem:[%s775] ss:$4 sm:$0xf]
  %v778 = vperm.slane %v776, 0
  %v779 = vperm.slane %v776, 1
  %v780 = vperm.slane %v776, 2
  %v781 = vperm.slane %v776, 3
  %v786 = vmul.f32 %v587, %v778
  %v787 = vmul.f32 %v616, %v779
  %v788 = vmul.f32 %v645, %v780
  %v789 = vmul.f32 %v674, %v781
  %v790 = vadd.f32 %v786, %v787
  %v791 = vadd.f32 %v790, %v788
  %v792 = vsel %vm692, %v789, 0.0
  %v793 = vadd.f32 %v791, %v792
  %794 = vadd.xlane.f32.xlu0 %v793
  %v795 = vpop.xlane.xlu0 %794
  %v796 = vadd.f32 %v763, %v795
  %v797 = vmul.f32 %v786, %v786
  %v798 = vmul.f32 %v787, %v787
  %v799 = vmul.f32 %v788, %v788
  %v800 = vmul.f32 %v789, %v789
  %v801 = vadd.f32 %v797, %v798
  %v802 = vadd.f32 %v801, %v799
  %v803 = vsel %vm692, %v800, 0.0
  %v804 = vadd.f32 %v802, %v803
  %805 = vadd.xlane.f32.xlu0 %v804
  %v806 = vpop.xlane.xlu0 %805
  %v807 = vadd.f32 %v774, %v806
  %v808 = vmul.f32 %v796, 0.00055555557
  %v809 = vmul.f32 %v807, 0.00055555557
  %v810 = vmul.f32 %v808, %v808
  %v811 = vsub.f32 %v809, %v810
  %v812 = vld [vmem:[%s4] sm:$0xff]
  %v813 = vadd.f32 %v811, 1e-05
  %v814 = vrsqrt.pop %v813
  %v815 = vmul.f32 %v814, %v813
  %v816 = vmul.f32 %v815, %v814
  %v817 = vmul.f32 0.5, %v816
  %v818 = vsub.f32 1.5, %v817
  %v819 = vmul.f32 %v814, %v818
  %vm820 = vweird.f32 %v813
  %vm821 = vweird.f32 %v814
  %vm822 = vmor %vm820, %vm821
  %v823 = vsel %vm822, %v814, %v819
  %v824 = vmul.f32 %v812, %v823
  %v825 = vld [vmem:[%s5] sm:$0xff]
  %v826 = vmul.f32 %v808, %v824
  %v827 = vsub.f32 %v825, %v826
  %829 = vset.pattern.permute.xlu0 0
  %830 = vperm.xlu0 %829, %v824
  %v831 = vpop.permute.xlu0 %830
  %v833 = vmul.f32 %v578, %v831
  %v834 = vmul.f32 %v607, %v831
  %v835 = vmul.f32 %v636, %v831
  %v836 = vmul.f32 %v665, %v831
  %838 = vset.pattern.permute.xlu0 0
  %839 = vperm.xlu0 %838, %v827
  %v840 = vpop.permute.xlu0 %839
  %v842 = vadd.f32 %v833, %v840
  %v843 = vadd.f32 %v834, %v840
  %v844 = vadd.f32 %v835, %v840
  %v845 = vadd.f32 %v836, %v840
  %v846 = vmax.f32 %v842, 0.0
  %v847 = vmax.f32 %v843, 0.0
  %v848 = vmax.f32 %v844, 0.0
  %v849 = vmax.f32 %v845, 0.0
  %850 = vst [vmem:[%s6] sm:$0xff] %v846
  %851 = vst [vmem:[%s6 + $0x8] sm:$0xff] %v847
  %852 = vst [vmem:[%s6 + $0x10] sm:$0xff] %v848
  %853 = vst.msk [vmem:[%s6 + $0x18] sm:$0xff] %vm692, %v849
  %v854 = vmul.f32 %v581, %v831
  %v855 = vmul.f32 %v610, %v831
  %v856 = vmul.f32 %v639, %v831
  %v857 = vmul.f32 %v668, %v831
  %v858 = vadd.f32 %v854, %v840
  %v859 = vadd.f32 %v855, %v840
  %v860 = vadd.f32 %v856, %v840
  %v861 = vadd.f32 %v857, %v840
  %v862 = vmax.f32 %v858, 0.0
  %v863 = vmax.f32 %v859, 0.0
  %v864 = vmax.f32 %v860, 0.0
  %v865 = vmax.f32 %v861, 0.0
  %866 = vst [vmem:[%s6 + $0x20] sm:$0xff] %v862
  %867 = vst [vmem:[%s6 + $0x28] sm:$0xff] %v863
  %868 = vst [vmem:[%s6 + $0x30] sm:$0xff] %v864
  %869 = vst.msk [vmem:[%s6 + $0x38] sm:$0xff] %vm692, %v865
  %v870 = vmul.f32 %v584, %v831
  %v871 = vmul.f32 %v613, %v831
  %v872 = vmul.f32 %v642, %v831
  %v873 = vmul.f32 %v671, %v831
  %v874 = vadd.f32 %v870, %v840
  %v875 = vadd.f32 %v871, %v840
  %v876 = vadd.f32 %v872, %v840
  %v877 = vadd.f32 %v873, %v840
  %v878 = vmax.f32 %v874, 0.0
  %v879 = vmax.f32 %v875, 0.0
  %v880 = vmax.f32 %v876, 0.0
  %v881 = vmax.f32 %v877, 0.0
  %882 = vst [vmem:[%s6 + $0x40] sm:$0xff] %v878
  %883 = vst [vmem:[%s6 + $0x48] sm:$0xff] %v879
  %884 = vst [vmem:[%s6 + $0x50] sm:$0xff] %v880
  %885 = vst.msk [vmem:[%s6 + $0x58] sm:$0xff] %vm692, %v881
  %v886 = vmul.f32 %v587, %v831
  %v887 = vmul.f32 %v616, %v831
  %v888 = vmul.f32 %v645, %v831
  %v889 = vmul.f32 %v674, %v831
  %v890 = vadd.f32 %v886, %v840
  %v891 = vadd.f32 %v887, %v840
  %v892 = vadd.f32 %v888, %v840
  %v893 = vadd.f32 %v889, %v840
  %v894 = vmax.f32 %v890, 0.0
  %v895 = vmax.f32 %v891, 0.0
  %v896 = vmax.f32 %v892, 0.0
  %v897 = vmax.f32 %v893, 0.0
  %898 = vst [vmem:[%s6 + $0x60] sm:$0xff] %v894
  %899 = vst [vmem:[%s6 + $0x68] sm:$0xff] %v895
  %900 = vst [vmem:[%s6 + $0x70] sm:$0xff] %v896
  %901 = vst.msk [vmem:[%s6 + $0x78] sm:$0xff] %vm692, %v897
  // Predicated region
  $region26: #{simple_gudi_upconv_block.1} parent=0 // pred_check
    _
  $region27: #{simple_gudi_upconv_block.1} parent=0 // pred_check_branch
    %903 = sbr.rel (0) target = $region29
  $region28: #{simple_gudi_upconv_block.1} parent=0 // pred_region
    _
  $region29: #{simple_gudi_upconv_block.1} parent=0 // pred_fallthru
    _
  // Predicated region
  $region30: #{simple_gudi_upconv_block.1} parent=0 // pred_check
    _
  $region31: #{simple_gudi_upconv_block.1} parent=0 // pred_check_branch
    %905 = sbr.rel (0) target = $region33
  $region32: #{simple_gudi_upconv_block.1} parent=0 // pred_region
    _
  $region33: #{simple_gudi_upconv_block.1} parent=0 // pred_fallthru
    _

</llo_original>
